<compile_context>
chip_gen: v7x
topology: tpu7x:2x2x1
jax: 0.10.0
libtpu: 0.0.40
codegen_flags: <defaults>
</compile_context>

<pallas_src>
import math

import jax
import jax.numpy as jnp
from jax.experimental import pallas as pl
from jax.experimental.pallas import tpu as pltpu


def make_positional_encoding(d_model: int, max_len: int = 5000,
                             dtype=jnp.float32) -> jnp.ndarray:
    """Deterministic sinusoidal PE buffer, identical to the PyTorch __init__.

    Pass dtype=<model dtype> so the buffer is cast ONCE at setup instead of on
    every forward call.
    """
    position = jnp.arange(max_len, dtype=jnp.float32)[:, None]            # (L, 1)
    div_term = jnp.exp(
        jnp.arange(0, d_model, 2, dtype=jnp.float32) * (-math.log(10000.0) / d_model)
    )                                                                      # (D/2,)
    angles = position * div_term                                           # (L, D/2)
    pe = jnp.zeros((max_len, d_model), dtype=jnp.float32)
    pe = pe.at[:, 0::2].set(jnp.sin(angles))
    pe = pe.at[:, 1::2].set(jnp.cos(angles))
    return pe.astype(dtype)                                                # (L, D)


def _add_pe_kernel(x_ref, pe_ref, o_ref):
    # x_ref/o_ref: (bt, ts, w) block; pe_ref: (ts, w) block shared across the
    # batch block -> single broadcast add, lane-dense store.
    o_ref[...] = x_ref[...] + pe_ref[...][None, :, :]


def _sublane(itemsize: int) -> int:
    # vreg packing: 4-byte -> 8 sublanes, 2-byte -> 16, 1-byte (int8/fp8) -> 32.
    return {1: 32, 2: 16, 4: 8}.get(itemsize, 8)


def _choose_lane_pack(seq_len: int, d_model: int, target_width: int = 2048) -> int:
    """Largest K dividing seq_len with K*d_model <= target_width, preferring a
    packed width that is a multiple of 128 (unmasked full-lane stores)."""
    if d_model >= target_width:
        return 1
    max_k = max(1, min(seq_len, target_width // d_model))
    best_any = 1
    for k in range(max_k, 0, -1):
        if seq_len % k == 0:
            if (k * d_model) % 128 == 0:
                return k               # largest 128-multiple-width divisor
            if best_any == 1:
                best_any = k           # largest divisor, fallback only
    return best_any


def _choose_seq_tile(s_rows: int, rows_budget: int, sublane: int) -> int:
    """Packed-sequence tile: full extent if it fits the budget, else the largest
    sublane-multiple divisor (every block full-width & unmasked); fall back to a
    sublane-aligned non-dividing tile (partial last block) only if no divisor."""
    if s_rows <= rows_budget:
        return s_rows
    cand = rows_budget - (rows_budget % sublane)
    while cand >= sublane:
        if s_rows % cand == 0:
            return cand
        cand -= sublane
    return max(sublane, rows_budget - (rows_budget % sublane))


def _choose_batch_tile(b: int, ts: int, s_rows: int, rows_budget: int) -> int:
    """Fold batch into the block when the whole (packed) sequence fits: largest
    divisor of b such that bt*ts stays within the row budget."""
    if ts < s_rows or b == 1:
        return 1
    target = min(b, max(1, rows_budget // max(ts, 1)))
    for bt in range(target, 0, -1):
        if b % bt == 0:
            return bt
    return 1


def positional_encoding_forward(x, pe, *, use_pallas=None, donate_x=False,
                                block_bytes: int = 4 << 20):
    """x: (B, S, D); pe: (max_len, D). Returns x + pe[:S] broadcast over batch."""
    b, s, d = x.shape
    pe_slice = pe[:s, :]
    if pe_slice.dtype != x.dtype:
        # Prefer building pe with make_positional_encoding(dtype=x.dtype) so this
        # per-call cast (an extra S*D HBM round trip) never happens.
        pe_slice = pe_slice.astype(x.dtype)

    itemsize = jnp.dtype(x.dtype).itemsize

    # Tiny inputs: a pallas_call is a fusion barrier with per-step overhead, so
    # below ~1 MiB let XLA fuse the add into the surrounding graph.
    if use_pallas is None:
        use_pallas = x.size * itemsize >= (1 << 20)
    if not use_pallas:
        return x + pe_slice[None, :, :]

    # --- lane-dense repack: (B, S, D) -> (B, S//K, K*D), pe -> (S//K, K*D) ---
    k = _choose_lane_pack(s, d)
    w = k * d
    s_rows = s // k
    x_r = x.reshape(b, s_rows, w)
    pe_r = pe_slice.reshape(s_rows, w)

    # --- block sizing: ~4 MiB per x/out block (85%+ of HBM roofline, amortizes
    # the fixed per-step cost on v7x's 3.2 TB/s HBM). Worst case scoped VMEM is
    # ~6 blocks double-buffered = ~24 MiB; vmem_limit_bytes below covers v5e. ---
    sublane = _sublane(itemsize)
    rows_budget = max(1, block_bytes // (w * itemsize))
    ts = _choose_seq_tile(s_rows, rows_budget, sublane)
    bt = _choose_batch_tile(b, ts, s_rows, rows_budget)

    n_seq = pl.cdiv(s_rows, ts)
    n_batch = pl.cdiv(b, bt)

    # Grid = (seq_tiles, batch_tiles): batch innermost so the PE tile's block
    # index is constant across consecutive steps (its HBM read amortized over B).
    grid_spec = pl.GridSpec(
        grid=(n_seq, n_batch),
        in_specs=[
            pl.BlockSpec((bt, ts, w), lambda j, i: (i, j, 0)),
            pl.BlockSpec((ts, w), lambda j, i: (j, 0)),
        ],
        out_specs=pl.BlockSpec((bt, ts, w), lambda j, i: (i, j, 0)),
    )

    cost = pl.CostEstimate(
        flops=b * s * d,
        transcendentals=0,
        bytes_accessed=2 * b * s * d * itemsize + s * d * itemsize,
    )

    out_r = pl.pallas_call(
        _add_pe_kernel,
        out_shape=jax.ShapeDtypeStruct((b, s_rows, w), x.dtype),
        grid_spec=grid_spec,
        compiler_params=pltpu.CompilerParams(
            dimension_semantics=("parallel", "parallel"),
            vmem_limit_bytes=32 * 1024 * 1024,
        ),
        cost_estimate=cost,
        input_output_aliases=({0: 0} if donate_x else {}),
    )(x_r, pe_r)

    return out_r.reshape(b, s, d)


if __name__ == "__main__":
    d_model = 128
    batch, seq_len = 2, 8
    max_len = 5000

    key = jax.random.PRNGKey(0)
    x = jax.random.normal(key, (batch, seq_len, d_model), dtype=jnp.float32)

    # Build the PE buffer once, pre-cast to the model dtype.
    pe = make_positional_encoding(d_model, max_len, dtype=x.dtype)

    # use_pallas=True: exercise the Pallas path even at this tiny demo size
    # (production callers get the auto size-based dispatch).
    out = positional_encoding_forward(x, pe, use_pallas=True)
    out = jax.block_until_ready(out)

    # sanity check against plain-JAX reference (same semantics as the PyTorch module)
    ref = x + pe[None, :seq_len, :]
    assert out.shape == (batch, seq_len, d_model)
    assert jnp.allclose(out, ref, atol=1e-6), "mismatch vs reference"

    print("KERNEL_OK")
</pallas_src>

<mosaic_0001>
module attributes {stable_mosaic.version = 11 : i64} {
  func.func @_add_pe_kernel(%arg0: i32, %arg1: i32, %arg2: memref<2x1x1024xf32, #tpu.memory_space<vmem>>, %arg3: memref<1x1024xf32, #tpu.memory_space<vmem>>, %arg4: memref<2x1x1024xf32, #tpu.memory_space<vmem>>) attributes {dimension_semantics = [#tpu.dimension_semantics<parallel>, #tpu.dimension_semantics<parallel>], iteration_bounds = array<i64: 1, 1>, scalar_prefetch = 0 : i64, scratch_operands = 0 : i64, tpu.core_type = #tpu.core_type<tc>, window_params = [{transform_indices = @transform_0, window_bounds = array<i64: 2, 1, 1024>}, {transform_indices = @transform_1, window_bounds = array<i64: 1, 1024>}, {transform_indices = @transform_2, window_bounds = array<i64: 2, 1, 1024>}]} {
    %c0 = arith.constant 0 : index
    %c0_0 = arith.constant 0 : index
    %c0_1 = arith.constant 0 : index
    %0 = vector.load %arg2[%c0, %c0_0, %c0_1] : memref<2x1x1024xf32, #tpu.memory_space<vmem>>, vector<2x1x1024xf32>
    %c0_2 = arith.constant 0 : index
    %c0_3 = arith.constant 0 : index
    %1 = vector.load %arg3[%c0_2, %c0_3] : memref<1x1024xf32, #tpu.memory_space<vmem>>, vector<1x1024xf32>
    %2 = vector.shape_cast %1 : vector<1x1024xf32> to vector<1x1x1024xf32>
    %3 = vector.broadcast %2 : vector<1x1x1024xf32> to vector<2x1x1024xf32>
    %4 = arith.addf %0, %3 : vector<2x1x1024xf32>
    %c0_4 = arith.constant 0 : index
    %c0_5 = arith.constant 0 : index
    %c0_6 = arith.constant 0 : index
    %5 = vector.load %arg4[%c0_4, %c0_5, %c0_6] : memref<2x1x1024xf32, #tpu.memory_space<vmem>>, vector<2x1x1024xf32>
    tpu.vector_store %arg4[%c0_4, %c0_5, %c0_6], %4 {strides = array<i32>} : memref<2x1x1024xf32, #tpu.memory_space<vmem>>, vector<2x1x1024xf32>,
    return
  }
  func.func @transform_0(%arg0: i32, %arg1: i32) -> (i32, i32, i32) {
    %c0_i32 = arith.constant 0 : i32
    %c0_i32_0 = arith.constant 0 : i32
    return %arg1, %arg0, %c0_i32 : i32, i32, i32
  }
  func.func @transform_1(%arg0: i32, %arg1: i32) -> (i32, i32) {
    %c0_i32 = arith.constant 0 : i32
    %c0_i32_0 = arith.constant 0 : i32
    return %arg0, %c0_i32 : i32, i32
  }
  func.func @transform_2(%arg0: i32, %arg1: i32) -> (i32, i32, i32) {
    %c0_i32 = arith.constant 0 : i32
    %c0_i32_0 = arith.constant 0 : i32
    return %arg1, %arg0, %c0_i32 : i32, i32, i32
  }
}

</mosaic_0001>

<llo_original>
// kernel: tpu_custom_call.1
$region0: #{tpu_custom_call.1}
  #allocation0 [shape = 'u32[]', space=smem, size = 0x4, offset = 0x4, fixed_abs, tag = 'smem constant byte address 0x4 - core index']
  #allocation1 [shape = 'u32[144,128]{1,0:T(1,128)}', space=vmem, size = 0x12000, scoped, tag = 'internal scratch']
  %s0 = inlined_call_operand.hbm [shape: f32[2,1,1024], index: 0, kind: input, shape index: {}]
  %s1 = inlined_call_operand.hbm [shape: f32[1,1024], index: 1, kind: input, shape index: {}]
  %s2 = inlined_call_operand.hbm [shape: f32[2,1,1024], index: 2, kind: output, shape index: {}]
  %s3 = sld [smem:[#allocation0]]
  $region26: #{tpu_custom_call.1} parent=0
    _
  %s5 = ssub.s32 1, %s3
  %s6 = scalar_select 0, %s5, %s3
  $region1: #{tpu_custom_call.1} parent=0
    #allocation2 [shape = 'u8[8192]{0}', space=vmem, size = 0x2000, scoped, tag = 'input window, operand 0, single buffered']
    #allocation3 [shape = 's32[1]{0}', space=sflag, size = 0x4, scoped, tag = 'scoped memory for tpu_custom_call.1']
    #allocation4 [shape = 's32[1]{0}', space=sflag, size = 0x4, scoped, tag = 'scoped memory for tpu_custom_call.1']
    #allocation5 [shape = 'u8[4096]{0}', space=vmem, size = 0x1000, scoped, tag = 'input window, operand 1, single buffered']
    #allocation6 [shape = 's32[1]{0}', space=sflag, size = 0x4, scoped, tag = 'scoped memory for tpu_custom_call.1']
    #allocation7 [shape = 'u8[8192]{0}', space=vmem, size = 0x2000, scoped, tag = 'output window, operand 0, single buffered']
    %7 = vsyncpa [#allocation3], 0
    %8 = vsyncpa [#allocation6], 0
    %9 = vsyncpa [#allocation4], 0
    // Predicated region
    $region2: #{tpu_custom_call.1} parent=1 // pred_check
      _
    $region3: #{tpu_custom_call.1} parent=1 // pred_check_branch
      %11 = sbr.rel (0) target = $region5
    $region4: #{tpu_custom_call.1} parent=1 // pred_region
      %s13 = ssub.s32 256, 256
      %14 = vsyncadd [#allocation3], %s13
      %s15 = sshll.u32 [#allocation2], 4
      %s16 = int_to_ptr.vmem [resolvable:$true] %s15
      %21 = dma.hbm_to_vmem [thread:$0]  %s0, 256, %s16, [#allocation3], 128, 128, 8
    $region5: #{tpu_custom_call.1} parent=1 // pred_fallthru
      _
    // Predicated region
    $region6: #{tpu_custom_call.1} parent=1 // pred_check
      _
    $region7: #{tpu_custom_call.1} parent=1 // pred_check_branch
      %23 = sbr.rel (0) target = $region9
    $region8: #{tpu_custom_call.1} parent=1 // pred_region
      %s25 = ssub.s32 128, 128
      %26 = vsyncadd [#allocation6], %s25
      %s28 = sshll.u32 [#allocation5], 4
      %s29 = int_to_ptr.vmem [resolvable:$true] %s28
      %31 = dma.hbm_to_vmem [thread:$0]  %s1, 128, %s29, [#allocation6]
    $region9: #{tpu_custom_call.1} parent=1 // pred_fallthru
      _
    // Predicated region
    $region10: #{tpu_custom_call.1} parent=1 // pred_check
      _
    $region11: #{tpu_custom_call.1} parent=1 // pred_check_branch
      %33 = sbr.rel (0) target = $region13
    $region12: #{tpu_custom_call.1} parent=1 // pred_region
      %34 = dma.done [#allocation3], 256
    $region13: #{tpu_custom_call.1} parent=1 // pred_fallthru
      _
    // Predicated region
    $region14: #{tpu_custom_call.1} parent=1 // pred_check
      _
    $region15: #{tpu_custom_call.1} parent=1 // pred_check_branch
      %36 = sbr.rel (0) target = $region17
    $region16: #{tpu_custom_call.1} parent=1 // pred_region
      %37 = dma.done [#allocation6], 128
    $region17: #{tpu_custom_call.1} parent=1 // pred_fallthru
      _
    %v38 = vld [vmem:[#allocation2] sm:$0xff]
    %v39 = vld [vmem:[#allocation2 + $0x8] sm:$0xff]
    %v40 = vld [vmem:[#allocation5] sm:$0xff]
    %v41 = vadd.f32 %v38, %v40
    %v42 = vadd.f32 %v39, %v40
    %43 = vst [vmem:[#allocation7] sm:$0xff] %v41
    %44 = vst [vmem:[#allocation7 + $0x8] sm:$0xff] %v42
    // Predicated region
    $region18: #{tpu_custom_call.1} parent=1 // pred_check
      _
    $region19: #{tpu_custom_call.1} parent=1 // pred_check_branch
      %46 = sbr.rel (0) target = $region21
    $region20: #{tpu_custom_call.1} parent=1 // pred_region
      %s48 = ssub.s32 256, 256
      %49 = vsyncadd [#allocation4], %s48
      %s50 = sshll.u32 [#allocation7], 4
      %s51 = int_to_ptr.vmem [resolvable:$true] %s50
      %56 = dma.vmem_to_hbm [thread:$0]  %s51, 256, %s2, [#allocation4], 128, 128, 8
    $region21: #{tpu_custom_call.1} parent=1 // pred_fallthru
      _
    // Predicated region
    $region22: #{tpu_custom_call.1} parent=1 // pred_check
      _
    $region23: #{tpu_custom_call.1} parent=1 // pred_check_branch
      %58 = sbr.rel (0) target = $region25
    $region24: #{tpu_custom_call.1} parent=1 // pred_region
      %59 = dma.done [#allocation4], 256
    $region25: #{tpu_custom_call.1} parent=1 // pred_fallthru
      _
    %60 = vsyncpa [#allocation3], 1
    %61 = vsyncpa [#allocation6], 1
    %62 = vsyncpa [#allocation4], 1

</llo_original>
